<compile_context>
chip_gen: v5e
topology: v5e:2x2
jax: 0.10.0
libtpu: 0.0.40
codegen_flags: <defaults>
</compile_context>

<pallas_src>
import functools

import jax
import jax.numpy as jnp
from jax.experimental import pallas as pl
from jax.experimental.pallas import tpu as pltpu


def _round_up(x, m):
    return ((x + m - 1) // m) * m


def _twig_tiny_kernel(x_ref, p_ref, out_ref, *, n_in):
    """One batch tile (batch on the lane axis).

    x_ref  : (n_in, TN)    -- [X_struct^T ; X_hps^T] tile (lane-dense)
    p_ref  : (17, P_COLS)  -- packed parameters (grid-invariant)
    out_ref: (1, TN)       -- sigmoid output tile (lane-dense)
    """
    f32 = jnp.float32
    p = p_ref[...]

    # Static unpacking of the packed parameter block.
    w12t = p[0:16, 0:n_in]              # block-diag [W1^T 0 ; 0 W2^T]  (16, n_in)
    b12 = p[0:16, n_in:n_in + 1]        # [b1 ; b2]                      (16, 1)
    w3t = p[16:17, 0:16]                # W3^T                           (1, 16)
    b3 = p[16:17, 16:17]                # b3                             (1, 1)

    # Fused linear_struct_1 / linear_hps_1 (+ biases) + ReLU  -> (16, TN)
    h = jnp.dot(w12t, x_ref[...], preferred_element_type=f32) + b12
    h = jnp.maximum(h, 0.0)

    # linear_integrate_1(concat([hs, hh], dim=1)) + sigmoid    -> (1, TN)
    z = jnp.dot(w3t, h, preferred_element_type=f32) + b3
    out_ref[...] = jax.nn.sigmoid(z)


@functools.partial(jax.jit, static_argnames=("tile_n",))
def twig_tiny_forward(x_struct, x_hps, params, *, tile_n=8192):
    n, n_struct = x_struct.shape
    _, n_hps = x_hps.shape
    n_in = n_struct + n_hps

    # --- choose a lane tile: multiple of 128, ~tile_n, padding bounded by
    # --- fewer than 128 lanes per grid step.
    g = max(1, -(-n // tile_n))                    # number of grid steps
    tile = _round_up(-(-n // g), 128)              # lane tile (multiple of 128)
    n_pad = g * tile

    # --- batch-on-lanes layout: single stacked, lane-dense activation stream.
    x_t = jnp.concatenate(
        [x_struct.astype(jnp.float32).T, x_hps.astype(jnp.float32).T], axis=0
    )                                              # (n_in, n)
    if n_pad != n:
        x_t = jnp.pad(x_t, ((0, 0), (0, n_pad - n)))

    # --- pack every weight / bias into one small grid-invariant ref.
    #   rows 0:16 -> [ block-diag(W1^T, W2^T) | [b1;b2] ]
    #   row  16   -> [ W3^T (16 entries) | b3 ]
    p_rows = 17
    p_cols = max(n_in + 1, 17)
    w1t = params["w1"].astype(jnp.float32).T       # (10, n_struct)
    w2t = params["w2"].astype(jnp.float32).T       # (6, n_hps)
    packed = jnp.zeros((p_rows, p_cols), jnp.float32)
    packed = packed.at[0:10, 0:n_struct].set(w1t)
    packed = packed.at[10:16, n_struct:n_in].set(w2t)
    packed = packed.at[0:10, n_in].set(params["b1"].astype(jnp.float32))
    packed = packed.at[10:16, n_in].set(params["b2"].astype(jnp.float32))
    packed = packed.at[16, 0:16].set(params["w3"].astype(jnp.float32)[:, 0])
    packed = packed.at[16, 16].set(params["b3"].astype(jnp.float32)[0])

    kernel = functools.partial(_twig_tiny_kernel, n_in=n_in)

    grid_spec = pltpu.PrefetchScalarGridSpec(
        num_scalar_prefetch=0,
        grid=(g,),
        in_specs=[
            pl.BlockSpec((n_in, tile), lambda i: (0, i)),
            pl.BlockSpec((p_rows, p_cols), lambda i: (0, 0)),
        ],
        out_specs=pl.BlockSpec((1, tile), lambda i: (0, i)),
    )

    out = pl.pallas_call(
        kernel,
        out_shape=jax.ShapeDtypeStruct((1, n_pad), jnp.float32),
        grid_spec=grid_spec,
        compiler_params=pltpu.CompilerParams(
            dimension_semantics=("parallel",),
        ),
    )(x_t, packed)

    # (1, n_pad) lane-dense slab -> (n, 1) column, matching the PyTorch output.
    return out[0, :n][:, None]


def init_params(key, n_struct, n_hps):
    """Deterministic synthetic parameters matching TWIG_Tiny's layer shapes.

    Weights are stored as (in_features, out_features), i.e. already transposed
    relative to torch.nn.Linear's (out, in) storage.
    """
    ks = jax.random.split(key, 6)
    scale = 0.1
    return {
        "w1": scale * jax.random.normal(ks[0], (n_struct, 10), jnp.float32),
        "b1": scale * jax.random.normal(ks[1], (10,), jnp.float32),
        "w2": scale * jax.random.normal(ks[2], (n_hps, 6), jnp.float32),
        "b2": scale * jax.random.normal(ks[3], (6,), jnp.float32),
        "w3": scale * jax.random.normal(ks[4], (16, 1), jnp.float32),  # 10 + 6
        "b3": scale * jax.random.normal(ks[5], (1,), jnp.float32),
    }


def reference_forward(x_struct, x_hps, params):
    """Pure-JAX reference of the exact PyTorch TWIG_Tiny forward semantics."""
    hs = jax.nn.relu(x_struct @ params["w1"] + params["b1"])
    hh = jax.nn.relu(x_hps @ params["w2"] + params["b2"])
    z = jnp.concatenate([hs, hh], axis=1) @ params["w3"] + params["b3"]
    return jax.nn.sigmoid(z)


if __name__ == "__main__":
    key = jax.random.PRNGKey(0)
    k_s, k_h, k_p = jax.random.split(key, 3)

    batch = 16
    n_struct = 12
    n_hps = 7

    x_struct = jax.random.normal(k_s, (batch, n_struct), jnp.float32)
    x_hps = jax.random.normal(k_h, (batch, n_hps), jnp.float32)
    params = init_params(k_p, n_struct, n_hps)

    out = twig_tiny_forward(x_struct, x_hps, params)
    out = jax.block_until_ready(out)

    ref = reference_forward(x_struct, x_hps, params)
    assert out.shape == (batch, 1)
    assert jnp.allclose(out, ref, atol=1e-5, rtol=1e-5), "mismatch vs reference"

    print("KERNEL_OK")
</pallas_src>

<mosaic_0001>
module attributes {stable_mosaic.version = 11 : i64} {
  func.func @_twig_tiny_kernel(%arg0: i32, %arg1: memref<19x128xf32, #tpu.memory_space<vmem>>, %arg2: memref<17x20xf32, #tpu.memory_space<vmem>>, %arg3: memref<1x128xf32, #tpu.memory_space<vmem>>) attributes {dimension_semantics = [#tpu.dimension_semantics<parallel>], iteration_bounds = array<i64: 1>, scalar_prefetch = 0 : i64, scratch_operands = 0 : i64, tpu.core_type = #tpu.core_type<tc>, window_params = [{transform_indices = @transform_0, window_bounds = array<i64: 19, 128>}, {pipeline_mode = #tpu.pipeline_mode<synchronous>, transform_indices = @transform_1, window_bounds = array<i64: 17, 20>}, {transform_indices = @transform_2, window_bounds = array<i64: 1, 128>}]} {
    %c0 = arith.constant 0 : index
    %c0_0 = arith.constant 0 : index
    %0 = vector.load %arg2[%c0, %c0_0] : memref<17x20xf32, #tpu.memory_space<vmem>>, vector<17x20xf32>
    %1 = vector.extract_strided_slice %0 {offsets = [0, 0], sizes = [16, 19], strides = [1, 1]} : vector<17x20xf32> to vector<16x19xf32>
    %2 = vector.extract_strided_slice %0 {offsets = [0, 19], sizes = [16, 1], strides = [1, 1]} : vector<17x20xf32> to vector<16x1xf32>
    %3 = vector.extract_strided_slice %0 {offsets = [16, 0], sizes = [1, 16], strides = [1, 1]} : vector<17x20xf32> to vector<1x16xf32>
    %4 = vector.extract_strided_slice %0 {offsets = [16, 16], sizes = [1, 1], strides = [1, 1]} : vector<17x20xf32> to vector<1x1xf32>
    %c0_1 = arith.constant 0 : index
    %c0_2 = arith.constant 0 : index
    %5 = vector.load %arg1[%c0_1, %c0_2] : memref<19x128xf32, #tpu.memory_space<vmem>>, vector<19x128xf32>
    %cst = arith.constant dense<0.000000e+00> : vector<16x128xf32>
    %6 = tpu.matmul %1, %5, %cst {dimension_numbers = #tpu.dot_dimension_numbers<[1], [0], [0], [1], [0, 0, 1, 1], [], []>} : vector<16x19xf32>, vector<19x128xf32>, vector<16x128xf32> -> vector<16x128xf32>
    %7 = vector.broadcast %2 : vector<16x1xf32> to vector<16x128xf32>
    %8 = arith.addf %6, %7 : vector<16x128xf32>
    %cst_3 = arith.constant 0.000000e+00 : f32
    %9 = vector.broadcast %cst_3 : f32 to vector<16x128xf32>
    %10 = arith.maximumf %8, %9 : vector<16x128xf32>
    %cst_4 = arith.constant dense<0.000000e+00> : vector<1x128xf32>
    %11 = tpu.matmul %3, %10, %cst_4 {dimension_numbers = #tpu.dot_dimension_numbers<[1], [0], [0], [1], [0, 0, 1, 1], [], []>} : vector<1x16xf32>, vector<16x128xf32>, vector<1x128xf32> -> vector<1x128xf32>
    %12 = vector.broadcast %4 : vector<1x1xf32> to vector<1x128xf32>
    %13 = arith.addf %11, %12 : vector<1x128xf32>
    %14 = arith.negf %13 : vector<1x128xf32>
    %15 = math.exp %14 : vector<1x128xf32>
    %cst_5 = arith.constant 1.000000e+00 : f32
    %16 = vector.broadcast %cst_5 : f32 to vector<1x128xf32>
    %17 = arith.addf %16, %15 : vector<1x128xf32>
    %18 = arith.divf %16, %17 : vector<1x128xf32>
    %c0_6 = arith.constant 0 : index
    %c0_7 = arith.constant 0 : index
    %19 = vector.load %arg3[%c0_6, %c0_7] : memref<1x128xf32, #tpu.memory_space<vmem>>, vector<1x128xf32>
    tpu.vector_store %arg3[%c0_6, %c0_7], %18 {strides = array<i32>} : memref<1x128xf32, #tpu.memory_space<vmem>>, vector<1x128xf32>,
    return
  }
  func.func @transform_0(%arg0: i32) -> (i32, i32) {
    %c0_i32 = arith.constant 0 : i32
    %c0_i32_0 = arith.constant 0 : i32
    return %c0_i32, %arg0 : i32, i32
  }
  func.func @transform_1(%arg0: i32) -> (i32, i32) {
    %c0_i32 = arith.constant 0 : i32
    %c0_i32_0 = arith.constant 0 : i32
    %c0_i32_1 = arith.constant 0 : i32
    return %c0_i32, %c0_i32_0 : i32, i32
  }
  func.func @transform_2(%arg0: i32) -> (i32, i32) {
    %c0_i32 = arith.constant 0 : i32
    %c0_i32_0 = arith.constant 0 : i32
    return %c0_i32, %arg0 : i32, i32
  }
}

</mosaic_0001>

<llo_original>
// kernel: twig_tiny_forward.1
$region0: #{twig_tiny_forward.1}
  #allocation0 [shape = 'u32[]', space=smem, size = 0x4, offset = 0x4, fixed_abs, tag = 'smem constant byte address 0x4 - core index']
  #allocation1 [shape = 'u32[72,128]{1,0:T(1,128)}', space=vmem, size = 0x9000, scoped, tag = 'internal scratch']
  %s0 = inlined_call_operand.vmem [shape: f32[19,128], index: 0, kind: input, shape index: {}]
  %s1 = inlined_call_operand.vmem [shape: f32[17,20], index: 1, kind: input, shape index: {}]
  %s2 = inlined_call_operand.vmem [shape: f32[1,128], index: 2, kind: output, shape index: {}]
  %s3 = sld [smem:[#allocation0]]
  $region18: #{twig_tiny_forward.1} parent=0
    _
  %s5 = ssub.s32 1, %s3
  %s6 = scalar_select 0, %s5, %s3
  // Predicated region
  $region2: #{twig_tiny_forward.1} parent=0 // pred_check
    _
  $region3: #{twig_tiny_forward.1} parent=0 // pred_check_branch
    %8 = sbr.rel (0) target = $region5
  $region4: #{twig_tiny_forward.1} parent=0 // pred_region
    _
  $region5: #{twig_tiny_forward.1} parent=0 // pred_fallthru
    _
  // Predicated region
  $region6: #{twig_tiny_forward.1} parent=0 // pred_check
    _
  $region7: #{twig_tiny_forward.1} parent=0 // pred_check_branch
    %10 = sbr.rel (0) target = $region9
  $region8: #{twig_tiny_forward.1} parent=0 // pred_region
    _
  $region9: #{twig_tiny_forward.1} parent=0 // pred_fallthru
    _
  %v11 = vld [vmem:[%s1] sm:$0xff]
  %v12 = vld [vmem:[%s1 + $0x8] sm:$0xff]
  %v13 = vld [vmem:[%s1 + $0x10] sm:$0x1]
  %v14 = vld [vmem:[%s0] sm:$0xff]
  %v15 = vld [vmem:[%s0 + $0x8] sm:$0xff]
  %v16 = vld [vmem:[%s0 + $0x10] sm:$0x7]
  %18 = vset.pattern.permute.xlu0 19
  %19 = vperm.xlu0 %18, %v11
  %v20 = vpop.permute.xlu0 %19
  %23 = vset.pattern.permute.xlu0 19
  %24 = vperm.xlu0 %23, %v12
  %v25 = vpop.permute.xlu0 %24
  %vm27 = vcmask 154624
  %v28 = vsel %vm27, %v11, 0
  %v30 = vsel %vm27, %v12, 0
  %vm32 = vcmask 1042432
  %v34 = vsel %vm32, %v16, 0
  %36 = vmatpush.msra.mxu0 0.0
  %37 = vmatpush.msra.mxu0 0.0
  %38 = vmatpush.msra.mxu0 0.0
  %39 = vmatpush.msra.mxu0 0.0
  %40 = vmatpush.msra.mxu0 0.0
  %41 = vmatpush.msra.mxu0 0.0
  %42 = vmatpush.msra.mxu0 0.0
  %43 = vmatpush.msra.mxu0 0.0
  %44 = vmatpush.msra.mxu0 0.0
  %45 = vmatpush.msra.mxu0 0.0
  %46 = vmatpush.msra.mxu0 0.0
  %47 = vmatpush.msra.mxu0 0.0
  %48 = vmatpush.msra.mxu0 0.0
  %49 = vmatpush.msra.mxu0 %v34
  %50 = vmatpush.msra.mxu0 %v15
  %51 = vmatpush.msra.mxu0 %v14
  %52 = vmatmul.f32.gmra.mxu0 %v28
  %v53 = vpop.f32.mrf.mxu0
  %v54 = vadd.f32 %v20, %v53
  %55 = vmatmul.f32.gmra.mxu0 %v30
  %v56 = vpop.f32.mrf.mxu0
  %v57 = vadd.f32 %v25, %v56
  %58 = vdwg.mxu0
  %v59 = vmax.f32 %v54, 0.0
  %v60 = vmax.f32 %v57, 0.0
  %62 = vset.pattern.permute.xlu0 16
  %63 = vperm.xlu0 %62, %v13
  %v64 = vpop.permute.xlu0 %63
  %vm66 = vcmask 130048
  %v67 = vsel %vm66, %v13, 0
  %69 = vmatpush.msra.mxu0 0.0
  %70 = vmatpush.msra.mxu0 0.0
  %71 = vmatpush.msra.mxu0 0.0
  %72 = vmatpush.msra.mxu0 0.0
  %73 = vmatpush.msra.mxu0 0.0
  %74 = vmatpush.msra.mxu0 0.0
  %75 = vmatpush.msra.mxu0 0.0
  %76 = vmatpush.msra.mxu0 0.0
  %77 = vmatpush.msra.mxu0 0.0
  %78 = vmatpush.msra.mxu0 0.0
  %79 = vmatpush.msra.mxu0 0.0
  %80 = vmatpush.msra.mxu0 0.0
  %81 = vmatpush.msra.mxu0 0.0
  %82 = vmatpush.msra.mxu0 0.0
  %83 = vmatpush.msra.mxu0 %v60
  %84 = vmatpush.msra.mxu0 %v59
  %85 = vmatmul.f32.gmra.mxu0 %v67
  %v86 = vpop.f32.mrf.mxu0
  %v87 = vadd.f32 %v64, %v86
  %88 = vdwg.mxu0
  %v89 = vxor.u32 %v87, 2147483648
  %v90 = vmul.f32 %v89, 1.442695
  %v91 = vpow.pop %v90
  %v92 = vadd.f32 %v91, 1.0
  %v93 = vrcp.pop %v92
  %v94 = vmul.f32 %v92, %v93
  %v95 = vsub.f32 1.0, %v94
  %v96 = vmul.f32 %v93, %v95
  %v97 = vadd.f32 %v93, %v96
  %vm98 = vweird.f32 %v92
  %vm99 = vweird.f32 %v93
  %vm100 = vmor %vm98, %vm99
  %v101 = vsel %vm100, %v93, %v97
  %v102 = vand.u32 2147483647, %v92
  %vm103 = vcmp.eq.f32.partialorder %v102, 8.507059e+37
  %v104 = vand.u32 %v92, 2147483648
  %v105 = vor.u32 1.1754944e-38, %v104
  %v106 = vsel %vm103, %v105, %v101
  %v107 = vmul.f32 1.0, %v106
  %108 = vst [vmem:[%s2] sm:$0x1] %v107
  // Predicated region
  $region10: #{twig_tiny_forward.1} parent=0 // pred_check
    _
  $region11: #{twig_tiny_forward.1} parent=0 // pred_check_branch
    %110 = sbr.rel (0) target = $region13
  $region12: #{twig_tiny_forward.1} parent=0 // pred_region
    _
  $region13: #{twig_tiny_forward.1} parent=0 // pred_fallthru
    _
  // Predicated region
  $region14: #{twig_tiny_forward.1} parent=0 // pred_check
    _
  $region15: #{twig_tiny_forward.1} parent=0 // pred_check_branch
    %112 = sbr.rel (0) target = $region17
  $region16: #{twig_tiny_forward.1} parent=0 // pred_region
    _
  $region17: #{twig_tiny_forward.1} parent=0 // pred_fallthru
    _

</llo_original>
